<compile_context>
chip_gen: v6e
topology: v6e:2x2x1
jax: 0.10.0
libtpu: 0.0.40
codegen_flags: <defaults>
</compile_context>

<pallas_src>
import functools

import jax
import jax.numpy as jnp
from jax.experimental import pallas as pl
from jax.experimental.pallas import tpu as pltpu


def _ce_label_smooth_kernel(x_ref, t_ref, o_ref, *,
                            epsilon, num_classes, true_batch, tile_b):
    """One batch tile -> one f32 partial sum of per-row smoothed-CE losses.

    x_ref: (TB, K) logits tile (input dtype; math in f32).
    t_ref: (B_pad, 1) int32 labels, untiled and resident in VMEM.
    o_ref: (1, 1, 1) f32 per-tile partial sum.
    """
    i = pl.program_id(0)

    x = x_ref[...].astype(jnp.float32)                        # (TB, K)
    tb, k = x.shape

    # Streaming reductions over the resident logits tile; only (TB,1) temps.
    m = jnp.max(x, axis=1, keepdims=True)                     # (TB, 1)
    sum_x = jnp.sum(x, axis=1, keepdims=True)                 # (TB, 1)
    lse = jnp.log(jnp.sum(jnp.exp(x - m), axis=1, keepdims=True))  # (TB, 1)

    # Labels for this tile, sliced from the resident full-batch block.
    start = pl.multiple_of(i * tile_b, 8)
    t = t_ref[pl.ds(start, tile_b), :]                        # (TB, 1) int32

    # x at the target class via a single masked sum (no one-hot / smooth matrix).
    # Precondition: 0 <= target < num_classes (out-of-range targets select nothing).
    col = jax.lax.broadcasted_iota(jnp.int32, (tb, k), 1)     # (TB, K)
    tgt_x = jnp.sum(jnp.where(col == t, x, 0.0),
                    axis=1, keepdims=True)                    # (TB, 1)

    # Mask rows that are batch padding (only relevant in the last tile).
    row = jax.lax.broadcasted_iota(jnp.int32, (tb, 1), 0) + i * tile_b
    valid = (row < true_batch).astype(jnp.float32)            # (TB, 1)

    per_row = ((m + lse)
               - (1.0 - epsilon) * tgt_x
               - (epsilon / float(num_classes)) * sum_x)      # (TB, 1)

    o_ref[...] = jnp.sum(per_row * valid, axis=(0, 1),
                         keepdims=True).reshape(1, 1, 1)


def cross_entropy_label_smooth(inputs, targets, *, num_classes, epsilon=0.1,
                               tile_b=1024):
    """inputs: (B, num_classes) float (f32 or bf16), targets: (B,) int labels.

    Returns scalar f32 loss, matching:
        log_probs = log_softmax(inputs, axis=1)
        smooth    = (1-eps)*one_hot(targets) + eps/num_classes
        loss      = (-smooth * log_probs).mean(0).sum()
    """
    B, K = inputs.shape
    assert K == num_classes
    t2d = targets.astype(jnp.int32).reshape(B, 1)

    # Tile: multiple of 8 rows (f32 sublane), at most `tile_b`, at least 8.
    tb = min(int(tile_b), ((B + 7) // 8) * 8)
    tb = max(8, (tb // 8) * 8)
    n_tiles = pl.cdiv(B, tb)
    b_pad = n_tiles * tb
    if b_pad != B:
        # Zero-pad batch; padded rows are masked out inside the kernel.
        inputs = jnp.pad(inputs, ((0, b_pad - B), (0, 0)))
        t2d = jnp.pad(t2d, ((0, b_pad - B), (0, 0)))

    kernel = functools.partial(
        _ce_label_smooth_kernel,
        epsilon=float(epsilon), num_classes=int(num_classes),
        true_batch=int(B), tile_b=int(tb),
    )
    partials = pl.pallas_call(
        kernel,
        out_shape=jax.ShapeDtypeStruct((n_tiles, 1, 1), jnp.float32),
        grid_spec=pltpu.PrefetchScalarGridSpec(
            num_scalar_prefetch=0,
            grid=(n_tiles,),
            in_specs=[
                # Pipelined logits tile (streamed in input dtype).
                pl.BlockSpec((tb, K), lambda i: (i, 0)),
                # Full labels block, constant index_map -> loaded once, resident.
                pl.BlockSpec((b_pad, 1), lambda i: (0, 0)),
            ],
            # One independent partial sum per tile -> no shared accumulator.
            out_specs=pl.BlockSpec((1, 1, 1), lambda i: (i, 0, 0)),
        ),
        compiler_params=pltpu.CompilerParams(
            # Independent per-tile outputs: safe to parallelize (megacore on v7x).
            dimension_semantics=("parallel",),
            # v5e default scoped VMEM is 16 MiB; TB=1024 f32 tiles need headroom.
            vmem_limit_bytes=32 * 1024 * 1024,
        ),
    )(inputs, t2d)
    # Tiny final reduction outside the kernel; divide by the TRUE batch size.
    return jnp.sum(partials) / jnp.float32(B)


def _reference(logits, labels, num_classes, eps):
    log_probs = jax.nn.log_softmax(logits.astype(jnp.float32), axis=1)
    onehot = jax.nn.one_hot(labels, num_classes, dtype=jnp.float32)
    smooth = (1.0 - eps) * onehot + eps / num_classes
    return jnp.sum(jnp.mean(-smooth * log_probs, axis=0))


if __name__ == "__main__":
    key = jax.random.PRNGKey(0)
    NUM_CLASSES, EPS = 751, 0.1

    # Case 1: small batch (single tile).
    k1, k2, k3, k4 = jax.random.split(key, 4)
    B1 = 8
    logits1 = jax.random.normal(k1, (B1, NUM_CLASSES), dtype=jnp.float32)
    labels1 = jax.random.randint(k2, (B1,), 0, NUM_CLASSES, dtype=jnp.int32)
    loss1 = jax.block_until_ready(
        cross_entropy_label_smooth(logits1, labels1, num_classes=NUM_CLASSES,
                                   epsilon=EPS))
    ref1 = _reference(logits1, labels1, NUM_CLASSES, EPS)
    assert jnp.allclose(loss1, ref1, rtol=1e-5, atol=1e-5), (loss1, ref1)

    # Case 2: batch not a multiple of the tile -> exercises multi-tile grid,
    # per-tile partial outputs, batch padding and row masking.
    B2 = 37
    logits2 = jax.random.normal(k3, (B2, NUM_CLASSES), dtype=jnp.float32)
    labels2 = jax.random.randint(k4, (B2,), 0, NUM_CLASSES, dtype=jnp.int32)
    loss2 = jax.block_until_ready(
        cross_entropy_label_smooth(logits2, labels2, num_classes=NUM_CLASSES,
                                   epsilon=EPS, tile_b=16))
    ref2 = _reference(logits2, labels2, NUM_CLASSES, EPS)
    assert jnp.allclose(loss2, ref2, rtol=1e-5, atol=1e-5), (loss2, ref2)

    print("KERNEL_OK")
</pallas_src>

<mosaic_0001>
module attributes {stable_mosaic.version = 11 : i64} {
  func.func @_ce_label_smooth_kernel(%arg0: i32, %arg1: memref<8x751xf32, #tpu.memory_space<vmem>>, %arg2: memref<8x1xi32, #tpu.memory_space<vmem>>, %arg3: memref<1x1x1xf32, #tpu.memory_space<vmem>>) attributes {dimension_semantics = [#tpu.dimension_semantics<parallel>], iteration_bounds = array<i64: 1>, scalar_prefetch = 0 : i64, scratch_operands = 0 : i64, tpu.core_type = #tpu.core_type<tc>, window_params = [{transform_indices = @transform_0, window_bounds = array<i64: 8, 751>}, {pipeline_mode = #tpu.pipeline_mode<synchronous>, transform_indices = @transform_1, window_bounds = array<i64: 8, 1>}, {transform_indices = @transform_2, window_bounds = array<i64: 1, 1, 1>}]} {
    %c0 = arith.constant 0 : index
    %c0_0 = arith.constant 0 : index
    %0 = vector.load %arg1[%c0, %c0_0] : memref<8x751xf32, #tpu.memory_space<vmem>>, vector<8x751xf32>
    %cst = arith.constant dense<0xFF800000> : vector<8xf32>
    %1 = vector.multi_reduction <maximumf>, %0, %cst [1] : vector<8x751xf32> to vector<8xf32>
    %2 = vector.shape_cast %1 : vector<8xf32> to vector<8x1xf32>
    %cst_1 = arith.constant dense<0.000000e+00> : vector<8xf32>
    %3 = vector.multi_reduction <add>, %0, %cst_1 [1] : vector<8x751xf32> to vector<8xf32>
    %4 = vector.shape_cast %3 : vector<8xf32> to vector<8x1xf32>
    %5 = vector.broadcast %2 : vector<8x1xf32> to vector<8x751xf32>
    %6 = arith.subf %0, %5 : vector<8x751xf32>
    %7 = math.exp %6 : vector<8x751xf32>
    %cst_2 = arith.constant dense<0.000000e+00> : vector<8xf32>
    %8 = vector.multi_reduction <add>, %7, %cst_2 [1] : vector<8x751xf32> to vector<8xf32>
    %9 = vector.shape_cast %8 : vector<8xf32> to vector<8x1xf32>
    %10 = math.log %9 : vector<8x1xf32>
    %c8_i32 = arith.constant 8 : i32
    %11 = arith.muli %arg0, %c8_i32 : i32
    %12 = tpu.assume_multiple %11, 8 : i32
    %13 = arith.index_cast %12 : i32 to index
    %c0_3 = arith.constant 0 : index
    %14 = vector.load %arg2[%13, %c0_3] : memref<8x1xi32, #tpu.memory_space<vmem>>, vector<8x1xi32>
    %15 = tpu.iota {dimensions = array<i32: 1>} : vector<8x751xi32>
    %16 = vector.broadcast %14 : vector<8x1xi32> to vector<8x751xi32>
    %17 = arith.cmpi eq, %15, %16 : vector<8x751xi32>
    %cst_4 = arith.constant 0.000000e+00 : f32
    %18 = vector.broadcast %cst_4 : f32 to vector<8x751xf32>
    %19 = arith.select %17, %0, %18 : vector<8x751xi1>, vector<8x751xf32>
    %cst_5 = arith.constant dense<0.000000e+00> : vector<8xf32>
    %20 = vector.multi_reduction <add>, %19, %cst_5 [1] : vector<8x751xf32> to vector<8xf32>
    %21 = vector.shape_cast %20 : vector<8xf32> to vector<8x1xf32>
    %22 = tpu.iota {dimensions = array<i32: 0>} : vector<8x1xi32>
    %c8_i32_6 = arith.constant 8 : i32
    %23 = arith.muli %arg0, %c8_i32_6 : i32
    %24 = vector.broadcast %23 : i32 to vector<8x1xi32>
    %25 = arith.addi %22, %24 : vector<8x1xi32>
    %c8_i32_7 = arith.constant 8 : i32
    %26 = vector.broadcast %c8_i32_7 : i32 to vector<8x1xi32>
    %27 = arith.cmpi slt, %25, %26 : vector<8x1xi32>
    %28 = arith.extui %27 : vector<8x1xi1> to vector<8x1xi32>
    %29 = arith.sitofp %28 : vector<8x1xi32> to vector<8x1xf32>
    %30 = arith.addf %2, %10 : vector<8x1xf32>
    %cst_8 = arith.constant 0.899999976 : f32
    %31 = vector.broadcast %cst_8 : f32 to vector<8x1xf32>
    %32 = arith.mulf %31, %21 : vector<8x1xf32>
    %33 = arith.subf %30, %32 : vector<8x1xf32>
    %cst_9 = arith.constant 1.33155787E-4 : f32
    %34 = vector.broadcast %cst_9 : f32 to vector<8x1xf32>
    %35 = arith.mulf %34, %4 : vector<8x1xf32>
    %36 = arith.subf %33, %35 : vector<8x1xf32>
    %37 = arith.mulf %36, %29 : vector<8x1xf32>
    %38 = vector.shape_cast %37 : vector<8x1xf32> to vector<1x8x1xf32>
    %cst_10 = arith.constant dense<0.000000e+00> : vector<1xf32>
    %39 = vector.multi_reduction <add>, %38, %cst_10 [1, 2] : vector<1x8x1xf32> to vector<1xf32>
    %40 = vector.shape_cast %39 : vector<1xf32> to vector<1x1x1xf32>
    %41 = vector.extract %40[0, 0, 0] : f32 from vector<1x1x1xf32>
    %42 = vector.broadcast %41 : f32 to vector<1x1xf32>
    %43 = vector.shape_cast %42 : vector<1x1xf32> to vector<1x1x1xf32>
    %c0_11 = arith.constant 0 : index
    %c0_12 = arith.constant 0 : index
    %c0_13 = arith.constant 0 : index
    %44 = vector.load %arg3[%c0_11, %c0_12, %c0_13] : memref<1x1x1xf32, #tpu.memory_space<vmem>>, vector<1x1x1xf32>
    tpu.vector_store %arg3[%c0_11, %c0_12, %c0_13], %43 {strides = array<i32>} : memref<1x1x1xf32, #tpu.memory_space<vmem>>, vector<1x1x1xf32>,
    return
  }
  func.func @transform_0(%arg0: i32) -> (i32, i32) {
    %c0_i32 = arith.constant 0 : i32
    %c0_i32_0 = arith.constant 0 : i32
    return %arg0, %c0_i32 : i32, i32
  }
  func.func @transform_1(%arg0: i32) -> (i32, i32) {
    %c0_i32 = arith.constant 0 : i32
    %c0_i32_0 = arith.constant 0 : i32
    %c0_i32_1 = arith.constant 0 : i32
    return %c0_i32, %c0_i32_0 : i32, i32
  }
  func.func @transform_2(%arg0: i32) -> (i32, i32, i32) {
    %c0_i32 = arith.constant 0 : i32
    %c0_i32_0 = arith.constant 0 : i32
    %c0_i32_1 = arith.constant 0 : i32
    return %arg0, %c0_i32, %c0_i32_0 : i32, i32, i32
  }
}

</mosaic_0001>

<llo_original>
// kernel: tpu_custom_call.1
$region0: #{tpu_custom_call.1}
  #allocation0 [shape = 'u32[]', space=smem, size = 0x4, offset = 0x4, fixed_abs, tag = 'smem constant byte address 0x4 - core index']
  #allocation1 [shape = 'u32[144,128]{1,0:T(1,128)}', space=vmem, size = 0x12000, scoped, tag = 'internal scratch']
  %s0 = inlined_call_operand.hbm [shape: f32[8,751], index: 0, kind: input, shape index: {}]
  %s1 = inlined_call_operand.vmem [shape: s32[8,1], index: 1, kind: input, shape index: {}]
  %s2 = inlined_call_operand.hbm [shape: f32[1,1,1], index: 2, kind: output, shape index: {}]
  %s3 = sld [smem:[#allocation0]]
  $region22: #{tpu_custom_call.1} parent=0
    _
  %s5 = ssub.s32 1, %s3
  %s6 = scalar_select 0, %s5, %s3
  $region1: #{tpu_custom_call.1} parent=0
    #allocation2 [shape = 'u8[24576]{0}', space=vmem, size = 0x6000, scoped, tag = 'input window, operand 0, single buffered']
    #allocation3 [shape = 's32[1]{0}', space=sflag, size = 0x4, scoped, tag = 'scoped memory for tpu_custom_call.1']
    #allocation4 [shape = 's32[1]{0}', space=sflag, size = 0x4, scoped, tag = 'scoped memory for tpu_custom_call.1']
    #allocation5 [shape = 'u8[512]{0}', space=vmem, size = 0x400, scoped, tag = 'output window, operand 0, single buffered']
    %7 = vsyncpa [#allocation3], 0
    %8 = vsyncpa [#allocation4], 0
    // Predicated region
    $region2: #{tpu_custom_call.1} parent=1 // pred_check
      _
    $region3: #{tpu_custom_call.1} parent=1 // pred_check_branch
      %10 = sbr.rel (0) target = $region5
    $region4: #{tpu_custom_call.1} parent=1 // pred_region
      %s12 = ssub.s32 768, 768
      %13 = vsyncadd [#allocation3], %s12
      %s15 = sshll.u32 [#allocation2], 4
      %s16 = int_to_ptr.vmem [resolvable:$true] %s15
      %18 = dma.hbm_to_vmem [thread:$0]  %s0, 768, %s16, [#allocation3]
    $region5: #{tpu_custom_call.1} parent=1 // pred_fallthru
      _
    // Predicated region
    $region6: #{tpu_custom_call.1} parent=1 // pred_check
      _
    $region7: #{tpu_custom_call.1} parent=1 // pred_check_branch
      %20 = sbr.rel (0) target = $region9
    $region8: #{tpu_custom_call.1} parent=1 // pred_region
      _
    $region9: #{tpu_custom_call.1} parent=1 // pred_fallthru
      _
    // Predicated region
    $region10: #{tpu_custom_call.1} parent=1 // pred_check
      _
    $region11: #{tpu_custom_call.1} parent=1 // pred_check_branch
      %22 = sbr.rel (0) target = $region13
    $region12: #{tpu_custom_call.1} parent=1 // pred_region
      %23 = dma.done [#allocation3], 768
    $region13: #{tpu_custom_call.1} parent=1 // pred_fallthru
      _
    %v24 = vld [vmem:[#allocation2] sm:$0xff]
    %v25 = vld [vmem:[#allocation2 + $0x8] sm:$0xff]
    %v26 = vld [vmem:[#allocation2 + $0x10] sm:$0xff]
    %v27 = vld [vmem:[#allocation2 + $0x18] sm:$0xff]
    %v28 = vld [vmem:[#allocation2 + $0x20] sm:$0xff]
    %v29 = vld [vmem:[#allocation2 + $0x28] sm:$0xff]
    %v30 = vmax.f32 %v24, %v28
    %vm31 = vcmask 908288
    %v32 = vsel %vm31, %v29, -inf
    %v33 = vmax.f32 %v25, %v32
    %v34 = vmax.f32 %v30, %v33
    %v35 = vmax.f32 %v26, %v27
    %v36 = vmax.f32 %v34, %v35
    %37 = vmax.xlane.f32.xlu0 %v36
    %v38 = vpop.xlane.xlu0 %37
    %v39 = vadd.f32 %v24, %v25
    %v40 = vadd.f32 %v39, %v26
    %v41 = vadd.f32 %v40, %v27
    %v42 = vadd.f32 %v41, %v28
    %v43 = vsel %vm31, %v29, 0.0
    %v44 = vadd.f32 %v42, %v43
    %45 = vadd.xlane.f32.xlu0 %v44
    %v46 = vpop.xlane.xlu0 %45
    %v47 = vsub.f32 %v24, %v38
    %v48 = vsub.f32 %v25, %v38
    %v49 = vsub.f32 %v26, %v38
    %v50 = vsub.f32 %v27, %v38
    %v51 = vsub.f32 %v28, %v38
    %v52 = vsub.f32 %v29, %v38
    %v53 = vmul.f32 %v47, 1.442695
    %v54 = vpow.pop %v53
    %v55 = vmul.f32 %v48, 1.442695
    %v56 = vpow.pop %v55
    %v57 = vmul.f32 %v49, 1.442695
    %v58 = vpow.pop %v57
    %v59 = vmul.f32 %v50, 1.442695
    %v60 = vpow.pop %v59
    %v61 = vmul.f32 %v51, 1.442695
    %v62 = vpow.pop %v61
    %v63 = vmul.f32 %v52, 1.442695
    %v64 = vpow.pop %v63
    %v65 = vadd.f32 %v54, %v56
    %v66 = vadd.f32 %v65, %v58
    %v67 = vadd.f32 %v66, %v60
    %v68 = vadd.f32 %v67, %v62
    %v69 = vsel %vm31, %v64, 0.0
    %v70 = vadd.f32 %v68, %v69
    %71 = vadd.xlane.f32.xlu0 %v70
    %v72 = vpop.xlane.xlu0 %71
    %v73 = vlog2.pop %v72
    %v74 = vmul.f32 %v73, 0.6931472
    %s75 = smul.u32 0, 8
    %s76 = scalar_lea.vmem %s1, %s75
    %v77 = vld [vmem:[%s76] sm:$0xff]
    %v78 = vlaneseq
    %v79 = vand.u32 %v78, 127
    %v80 = vadd.s32 %v79, 128
    %v81 = vadd.s32 %v79, 256
    %v82 = vadd.s32 %v79, 384
    %v83 = vadd.s32 %v79, 512
    %v84 = vadd.s32 %v79, 640
    %85 = vset.pattern.permute.xlu0 0
    %86 = vperm.xlu0 %85, %v77
    %v87 = vpop.permute.xlu0 %86
    %vm88 = vcmp.eq.s32.totalorder %v79, %v87
    %vm89 = vcmp.eq.s32.totalorder %v80, %v87
    %vm90 = vcmp.eq.s32.totalorder %v81, %v87
    %vm91 = vcmp.eq.s32.totalorder %v82, %v87
    %vm92 = vcmp.eq.s32.totalorder %v83, %v87
    %vm93 = vcmp.eq.s32.totalorder %v84, %v87
    %v94 = vsel %vm88, %v24, 0.0
    %v95 = vsel %vm89, %v25, 0.0
    %v96 = vsel %vm90, %v26, 0.0
    %v97 = vsel %vm91, %v27, 0.0
    %v98 = vsel %vm92, %v28, 0.0
    %v99 = vsel %vm93, %v29, 0.0
    %v100 = vadd.f32 %v94, %v95
    %v101 = vadd.f32 %v100, %v96
    %v102 = vadd.f32 %v101, %v97
    %v103 = vadd.f32 %v102, %v98
    %v104 = vsel %vm31, %v99, 0.0
    %v105 = vadd.f32 %v103, %v104
    %106 = vadd.xlane.f32.xlu0 %v105
    %v107 = vpop.xlane.xlu0 %106
    %v108 = vlaneseq
    %v109 = vshrl.u32 %v108, 7
    %v110 = vstv %s75
    %v111 = vadd.s32 %v109, %v110
    %vm112 = vcmp.lt.s32.totalorder %v111, 8
    %v113 = vsel %vm112, 1, 0
    %v114 = vcvt.s32.f32 %v113
    %v115 = vadd.f32 %v38, %v74
    %v116 = vmul.f32 %v107, 0.9
    %v117 = vsub.f32 %v115, %v116
    %v118 = vmul.f32 %v46, 0.00013315579
    %v119 = vsub.f32 %v117, %v118
    %v120 = vmul.f32 %v119, %v114
    %vm121 = vcmask 7168
    %v122 = vsel %vm121, %v120, 0.0
    %123 = vadd.xlane.f32.xlu0 %v122
    %v124 = vpop.xlane.xlu0 %123
    %v125 = vrot.slane %v124, 4
    %v126 = vadd.f32 %v124, %v125
    %v127 = vrot.slane %v126, 2
    %v128 = vadd.f32 %v126, %v127
    %v129 = vrot.slane %v128, 1
    %v130 = vadd.f32 %v128, %v129
    %s131 = vtos %v130
    %v132 = vstv %s131
    %vm133 = vcmask 0
    %134 = vst.msk [vmem:[#allocation5] sm:$0x1] %vm133, %v132
    // Predicated region
    $region14: #{tpu_custom_call.1} parent=1 // pred_check
      _
    $region15: #{tpu_custom_call.1} parent=1 // pred_check_branch
      %136 = sbr.rel (0) target = $region17
    $region16: #{tpu_custom_call.1} parent=1 // pred_region
      %s138 = ssub.s32 16, 16
      %139 = vsyncadd [#allocation4], %s138
      %s141 = sshll.u32 [#allocation5], 4
      %s142 = int_to_ptr.vmem [resolvable:$true] %s141
      %144 = dma.vmem_to_hbm [thread:$0]  %s142, 16, %s2, [#allocation4]
    $region17: #{tpu_custom_call.1} parent=1 // pred_fallthru
      _
    // Predicated region
    $region18: #{tpu_custom_call.1} parent=1 // pred_check
      _
    $region19: #{tpu_custom_call.1} parent=1 // pred_check_branch
      %146 = sbr.rel (0) target = $region21
    $region20: #{tpu_custom_call.1} parent=1 // pred_region
      %147 = dma.done [#allocation4], 16
    $region21: #{tpu_custom_call.1} parent=1 // pred_fallthru
      _
    %148 = vsyncpa [#allocation3], 1
    %149 = vsyncpa [#allocation4], 1

</llo_original>
